<compile_context>
chip_gen: v7x
topology: tpu7x:2x2x1
jax: 0.10.0
libtpu: 0.0.40
codegen_flags: <defaults>
</compile_context>

<pallas_src>
import functools

import jax
import jax.numpy as jnp
from jax.experimental import pallas as pl
from jax.experimental.pallas import tpu as pltpu


def _round_up(x, m):
    return (x + m - 1) // m * m


def _maybe_pad2(x, rows, cols, dtype):
    """Cast then zero-pad a 2-D array only if padding is actually needed."""
    x = x.astype(dtype)
    r, c = x.shape
    if r == rows and c == cols:
        return x
    return jnp.pad(x, ((0, rows - r), (0, cols - c)))


def _elementwise_dtype(compute_dtype):
    """bf16 bias+sigmoid on chips with a bf16 VPU/EUP (v6e/v7x); f32 otherwise."""
    if jnp.dtype(compute_dtype) != jnp.dtype(jnp.bfloat16):
        return jnp.float32
    try:
        kind = jax.devices()[0].device_kind.lower()
    except Exception:
        return jnp.float32
    return jnp.bfloat16 if any(t in kind for t in ("v6", "v7", "7x")) else jnp.float32


def _vmem_budget_and_limit():
    """Generation-aware VMEM budget for tile selection + vmem_limit cap."""
    try:
        cap = int(pltpu.get_tpu_info().vmem_capacity_bytes)
    except Exception:
        cap = 64 * 1024 * 1024  # conservative fallback: v7x per-TensorCore VMEM
    headroom = 16 * 1024 * 1024
    budget = min(cap - headroom, int(cap * 0.8))   # ~102 MiB on 128 MiB, ~48 MiB on 64 MiB
    limit_cap = cap - 12 * 1024 * 1024             # never ask for the full physical VMEM
    return budget, limit_cap


def _vmem_bytes(tm, na, nb, ha, hb, zp, in_bytes, act_bytes, out_bytes):
    x_bytes = 2 * tm * (na + nb) * in_bytes                       # double-buffered x tiles
    w_bytes = ((na * ha + ha * zp + nb * hb + hb * zp) * in_bytes  # single-buffered weights
               + (ha + hb) * act_bytes + 2 * zp * 4)               # + biases
    o_bytes = 2 * 2 * tm * zp * out_bytes                          # double-buffered z tiles
    h_bytes = tm * (ha + hb) * (4 + act_bytes)                     # f32 accum + activations
    return x_bytes + w_bytes + o_bytes + h_bytes


def _choose_tm(batch, na, nb, ha, hb, zp, in_bytes, act_bytes, out_bytes, budget):
    """Batch tile: multiple of 8, <=512, aiming for >=4 grid steps, within VMEM budget."""
    batch8 = _round_up(batch, 8)
    tm = min(512, batch8, max(8, _round_up(pl.cdiv(batch8, 4), 8)))
    while tm > 8 and _vmem_bytes(tm, na, nb, ha, hb, zp,
                                 in_bytes, act_bytes, out_bytes) > budget:
        tm = max(8, _round_up(tm // 2, 8))
    return tm


def _encode_tile(x_ref, w1_ref, b1_ref, w2_ref, b2_ref, z_ref, *, act_dtype, precision):
    """z = sigmoid(x @ W1 + b1) @ W2 + b2 on one (TM, *) batch tile."""
    # First layer: MXU matmul, f32 accumulation.
    h = jnp.dot(x_ref[...], w1_ref[...],
                preferred_element_type=jnp.float32, precision=precision)
    # Bias + sigmoid in act_dtype (bf16 where the VPU/EUP support it, else f32).
    h = jax.nn.sigmoid(h.astype(act_dtype) + b1_ref[...])
    # Second layer: feed activations to the MXU in the weight dtype.
    z = jnp.dot(h.astype(w2_ref.dtype), w2_ref[...],
                preferred_element_type=jnp.float32, precision=precision)
    # Bias add stays f32; single cast on the lane-dense store.
    z_ref[...] = (z + b2_ref[...]).astype(z_ref.dtype)


def _dcca_fused_kernel(xa_ref, w1a_ref, b1a_ref, w2a_ref, b2a_ref,
                       xb_ref, w1b_ref, b1b_ref, w2b_ref, b2b_ref,
                       za_ref, zb_ref, *, act_dtype, precision):
    _encode_tile(xa_ref, w1a_ref, b1a_ref, w2a_ref, b2a_ref, za_ref,
                 act_dtype=act_dtype, precision=precision)
    _encode_tile(xb_ref, w1b_ref, b1b_ref, w2b_ref, b2b_ref, zb_ref,
                 act_dtype=act_dtype, precision=precision)


def dcca_forward(x_a, x_b, params_a, params_b,
                 compute_dtype=jnp.bfloat16, out_dtype=None, precision=None):
    """DCCA.forward: encode both views in one fused Pallas call, return (z_a, z_b).

    compute_dtype: MXU operand dtype (bf16 default; f32 for a reference-precision run).
    out_dtype:     dtype of the returned z (defaults to compute_dtype; pass
                   jnp.float32 if the downstream eigh-based CCA loss needs it).
    precision:     forwarded to the in-kernel dots (pass jax.lax.Precision.HIGHEST
                   for bit-level f32 matmul semantics).
    """
    w1a, b1a, w2a, b2a = params_a
    w1b, b1b, w2b, b2b = params_b

    batch = x_a.shape[0]
    na, nb = x_a.shape[1], x_b.shape[1]
    ha, hb = w1a.shape[1], w1b.shape[1]
    zd = w2a.shape[1]
    assert x_b.shape[0] == batch and w2b.shape[1] == zd

    out_dtype = compute_dtype if out_dtype is None else out_dtype
    act_dtype = _elementwise_dtype(compute_dtype)

    # Only the OUTPUT lane dim needs 128-padding (unmasked vst); inputs and the
    # contraction dims stay unpadded (block shape == full array dim is legal).
    z_p = _round_up(zd, 128)

    in_bytes = jnp.dtype(compute_dtype).itemsize
    act_bytes = jnp.dtype(act_dtype).itemsize
    out_bytes = jnp.dtype(out_dtype).itemsize

    budget, limit_cap = _vmem_budget_and_limit()
    tm = _choose_tm(batch, na, nb, ha, hb, z_p, in_bytes, act_bytes, out_bytes, budget)
    batch_p = _round_up(batch, tm)
    grid = (batch_p // tm,)

    f32 = jnp.float32
    xa_p = _maybe_pad2(x_a, batch_p, na, compute_dtype)
    xb_p = _maybe_pad2(x_b, batch_p, nb, compute_dtype)
    w1a_p = _maybe_pad2(w1a, na, ha, compute_dtype)
    w2a_p = _maybe_pad2(w2a, ha, z_p, compute_dtype)
    w1b_p = _maybe_pad2(w1b, nb, hb, compute_dtype)
    w2b_p = _maybe_pad2(w2b, hb, z_p, compute_dtype)
    b1a_p = _maybe_pad2(b1a, 1, ha, act_dtype)
    b1b_p = _maybe_pad2(b1b, 1, hb, act_dtype)
    b2a_p = _maybe_pad2(b2a, 1, z_p, f32)
    b2b_p = _maybe_pad2(b2b, 1, z_p, f32)

    x_map = lambda i: (i, 0)    # batch-tiled, streamed (double-buffered)
    w_map = lambda i: (0, 0)    # resident across the whole grid

    def _stream_spec(shape):
        return pl.BlockSpec(shape, x_map)

    def _resident_spec(shape):
        # Constant index_map => block never changes; single-buffer it so it
        # doesn't pay the default 2x double-buffering VMEM cost.
        try:
            return pl.BlockSpec(shape, w_map, pipeline_mode=pl.Buffered(1))
        except Exception:
            return pl.BlockSpec(shape, w_map)

    in_specs = (
        _stream_spec((tm, na)),
        _resident_spec((na, ha)),
        _resident_spec((1, ha)),
        _resident_spec((ha, z_p)),
        _resident_spec((1, z_p)),
        _stream_spec((tm, nb)),
        _resident_spec((nb, hb)),
        _resident_spec((1, hb)),
        _resident_spec((hb, z_p)),
        _resident_spec((1, z_p)),
    )
    out_specs = (
        pl.BlockSpec((tm, z_p), x_map),
        pl.BlockSpec((tm, z_p), x_map),
    )
    out_shape = (
        jax.ShapeDtypeStruct((batch_p, z_p), out_dtype),
        jax.ShapeDtypeStruct((batch_p, z_p), out_dtype),
    )

    # Scheduler hints from the REAL (unpadded-where-possible) dims.
    flops = 2 * batch_p * (na * ha + ha * z_p + nb * hb + hb * z_p)
    transcendentals = batch_p * (ha + hb)
    bytes_accessed = (
        (xa_p.size + xb_p.size) * in_bytes
        + (w1a_p.size + w2a_p.size + w1b_p.size + w2b_p.size) * in_bytes
        + (b1a_p.size + b1b_p.size) * act_bytes
        + (b2a_p.size + b2b_p.size) * 4
        + 2 * batch_p * z_p * out_bytes
    )

    vbytes = _vmem_bytes(tm, na, nb, ha, hb, z_p, in_bytes, act_bytes, out_bytes)
    vmem_limit = int(min(max(2 * vbytes, 32 * 1024 * 1024), limit_cap))

    kernel = functools.partial(_dcca_fused_kernel,
                               act_dtype=act_dtype, precision=precision)

    za_p, zb_p = pl.pallas_call(
        kernel,
        out_shape=out_shape,
        grid=grid,
        in_specs=in_specs,
        out_specs=out_specs,
        compiler_params=pltpu.CompilerParams(
            dimension_semantics=("parallel",),
            vmem_limit_bytes=vmem_limit,
        ),
        cost_estimate=pl.CostEstimate(
            flops=int(flops),
            transcendentals=int(transcendentals),
            bytes_accessed=int(bytes_accessed),
        ),
    )(xa_p, w1a_p, b1a_p, w2a_p, b2a_p, xb_p, w1b_p, b1b_p, w2b_p, b2b_p)

    if batch_p == batch and z_p == zd:
        return za_p, zb_p
    return za_p[:batch, :zd], zb_p[:batch, :zd]


def init_encoder_params(key, n_in, hidden, z_dim):
    """Deterministic synthetic weights (shapes match nn.Linear layers, stored (in,out))."""
    k1, k2, k3, k4 = jax.random.split(key, 4)
    w1 = jax.random.uniform(k1, (n_in, hidden), jnp.float32,
                            minval=-1.0, maxval=1.0) / jnp.sqrt(n_in)
    b1 = jax.random.uniform(k2, (1, hidden), jnp.float32,
                            minval=-1.0, maxval=1.0) / jnp.sqrt(n_in)
    w2 = jax.random.uniform(k3, (hidden, z_dim), jnp.float32,
                            minval=-1.0, maxval=1.0) / jnp.sqrt(hidden)
    b2 = jax.random.uniform(k4, (1, z_dim), jnp.float32,
                            minval=-1.0, maxval=1.0) / jnp.sqrt(hidden)
    return (w1, b1, w2, b2)


if __name__ == "__main__":
    # Small shapes consistent with DCCA(n_a, n_b, z_dim, layers=[hidden]).
    batch, n_a, n_b, hidden, z_dim = 16, 32, 24, 32, 8

    key = jax.random.PRNGKey(0)
    k_xa, k_xb, k_pa, k_pb = jax.random.split(key, 4)

    x_a = jax.random.normal(k_xa, (batch, n_a), jnp.float32)
    x_b = jax.random.normal(k_xb, (batch, n_b), jnp.float32)

    params_a = init_encoder_params(k_pa, n_a, hidden, z_dim)
    params_b = init_encoder_params(k_pb, n_b, hidden, z_dim)

    # Default fast path: bf16 MXU operands + bf16 output, f32 accumulation.
    fwd_bf16 = jax.jit(functools.partial(dcca_forward, compute_dtype=jnp.bfloat16))
    z_a, z_b = fwd_bf16(x_a, x_b, params_a, params_b)
    jax.block_until_ready((z_a, z_b))

    # f32 path for a tight semantics check (default matmul precision on both sides).
    fwd_f32 = jax.jit(functools.partial(dcca_forward, compute_dtype=jnp.float32))
    z_a32, z_b32 = fwd_f32(x_a, x_b, params_a, params_b)
    jax.block_until_ready((z_a32, z_b32))

    # Pure-JAX reference of the forward semantics.
    def ref_enc(x, w1, b1, w2, b2):
        return jax.nn.sigmoid(x @ w1 + b1) @ w2 + b2

    ref_a = ref_enc(x_a, *params_a)
    ref_b = ref_enc(x_b, *params_b)

    assert z_a.shape == (batch, z_dim) and z_b.shape == (batch, z_dim)
    assert jnp.allclose(z_a32, ref_a, atol=1e-5), "f32 z_a mismatch vs reference"
    assert jnp.allclose(z_b32, ref_b, atol=1e-5), "f32 z_b mismatch vs reference"
    # bf16 MXU operands / bf16 output -> loosened tolerance.
    assert jnp.allclose(z_a, ref_a, atol=2e-2, rtol=2e-2), "bf16 z_a mismatch vs reference"
    assert jnp.allclose(z_b, ref_b, atol=2e-2, rtol=2e-2), "bf16 z_b mismatch vs reference"

    print("KERNEL_OK")
</pallas_src>

<mosaic_0001>
module attributes {stable_mosaic.version = 11 : i64} {
  func.func @_dcca_fused_kernel(%arg0: i32, %arg1: memref<8x32xbf16, #tpu.memory_space<vmem>>, %arg2: memref<32x32xbf16, #tpu.memory_space<vmem>>, %arg3: memref<1x32xf32, #tpu.memory_space<vmem>>, %arg4: memref<32x128xbf16, #tpu.memory_space<vmem>>, %arg5: memref<1x128xf32, #tpu.memory_space<vmem>>, %arg6: memref<8x24xbf16, #tpu.memory_space<vmem>>, %arg7: memref<24x32xbf16, #tpu.memory_space<vmem>>, %arg8: memref<1x32xf32, #tpu.memory_space<vmem>>, %arg9: memref<32x128xbf16, #tpu.memory_space<vmem>>, %arg10: memref<1x128xf32, #tpu.memory_space<vmem>>, %arg11: memref<8x128xbf16, #tpu.memory_space<vmem>>, %arg12: memref<8x128xbf16, #tpu.memory_space<vmem>>) attributes {dimension_semantics = [#tpu.dimension_semantics<parallel>], iteration_bounds = array<i64: 2>, scalar_prefetch = 0 : i64, scratch_operands = 0 : i64, tpu.core_type = #tpu.core_type<tc>, window_params = [{transform_indices = @transform_0, window_bounds = array<i64: 8, 32>}, {pipeline_mode = #tpu.pipeline_mode<synchronous>, transform_indices = @transform_1, window_bounds = array<i64: 32, 32>}, {pipeline_mode = #tpu.pipeline_mode<synchronous>, transform_indices = @transform_2, window_bounds = array<i64: 1, 32>}, {pipeline_mode = #tpu.pipeline_mode<synchronous>, transform_indices = @transform_3, window_bounds = array<i64: 32, 128>}, {pipeline_mode = #tpu.pipeline_mode<synchronous>, transform_indices = @transform_4, window_bounds = array<i64: 1, 128>}, {transform_indices = @transform_5, window_bounds = array<i64: 8, 24>}, {pipeline_mode = #tpu.pipeline_mode<synchronous>, transform_indices = @transform_6, window_bounds = array<i64: 24, 32>}, {pipeline_mode = #tpu.pipeline_mode<synchronous>, transform_indices = @transform_7, window_bounds = array<i64: 1, 32>}, {pipeline_mode = #tpu.pipeline_mode<synchronous>, transform_indices = @transform_8, window_bounds = array<i64: 32, 128>}, {pipeline_mode = #tpu.pipeline_mode<synchronous>, transform_indices = @transform_9, window_bounds = array<i64: 1, 128>}, {transform_indices = @transform_10, window_bounds = array<i64: 8, 128>}, {transform_indices = @transform_11, window_bounds = array<i64: 8, 128>}]} {
    %c0 = arith.constant 0 : index
    %c0_0 = arith.constant 0 : index
    %0 = vector.load %arg1[%c0, %c0_0] : memref<8x32xbf16, #tpu.memory_space<vmem>>, vector<8x32xbf16>
    %c0_1 = arith.constant 0 : index
    %c0_2 = arith.constant 0 : index
    %1 = vector.load %arg2[%c0_1, %c0_2] : memref<32x32xbf16, #tpu.memory_space<vmem>>, vector<32x32xbf16>
    %cst = arith.constant dense<0.000000e+00> : vector<8x32xf32>
    %2 = tpu.matmul %0, %1, %cst {dimension_numbers = #tpu.dot_dimension_numbers<[1], [0], [0], [1], [0, 0, 1, 1], [], []>} : vector<8x32xbf16>, vector<32x32xbf16>, vector<8x32xf32> -> vector<8x32xf32>
    %c0_3 = arith.constant 0 : index
    %c0_4 = arith.constant 0 : index
    %3 = vector.load %arg3[%c0_3, %c0_4] : memref<1x32xf32, #tpu.memory_space<vmem>>, vector<1x32xf32>
    %4 = vector.broadcast %3 : vector<1x32xf32> to vector<8x32xf32>
    %5 = arith.addf %2, %4 : vector<8x32xf32>
    %6 = arith.negf %5 : vector<8x32xf32>
    %7 = math.exp %6 : vector<8x32xf32>
    %cst_5 = arith.constant 1.000000e+00 : f32
    %8 = vector.broadcast %cst_5 : f32 to vector<8x32xf32>
    %9 = arith.addf %8, %7 : vector<8x32xf32>
    %10 = arith.divf %8, %9 : vector<8x32xf32>
    %11 = arith.truncf %10 : vector<8x32xf32> to vector<8x32xbf16>
    %c0_6 = arith.constant 0 : index
    %c0_7 = arith.constant 0 : index
    %12 = vector.load %arg4[%c0_6, %c0_7] : memref<32x128xbf16, #tpu.memory_space<vmem>>, vector<32x128xbf16>
    %cst_8 = arith.constant dense<0.000000e+00> : vector<8x128xf32>
    %13 = tpu.matmul %11, %12, %cst_8 {dimension_numbers = #tpu.dot_dimension_numbers<[1], [0], [0], [1], [0, 0, 1, 1], [], []>} : vector<8x32xbf16>, vector<32x128xbf16>, vector<8x128xf32> -> vector<8x128xf32>
    %c0_9 = arith.constant 0 : index
    %c0_10 = arith.constant 0 : index
    %14 = vector.load %arg5[%c0_9, %c0_10] : memref<1x128xf32, #tpu.memory_space<vmem>>, vector<1x128xf32>
    %15 = vector.broadcast %14 : vector<1x128xf32> to vector<8x128xf32>
    %16 = arith.addf %13, %15 : vector<8x128xf32>
    %17 = arith.truncf %16 : vector<8x128xf32> to vector<8x128xbf16>
    %c0_11 = arith.constant 0 : index
    %c0_12 = arith.constant 0 : index
    %18 = vector.load %arg11[%c0_11, %c0_12] : memref<8x128xbf16, #tpu.memory_space<vmem>>, vector<8x128xbf16>
    tpu.vector_store %arg11[%c0_11, %c0_12], %17 {strides = array<i32>} : memref<8x128xbf16, #tpu.memory_space<vmem>>, vector<8x128xbf16>,
    %c0_13 = arith.constant 0 : index
    %c0_14 = arith.constant 0 : index
    %19 = vector.load %arg6[%c0_13, %c0_14] : memref<8x24xbf16, #tpu.memory_space<vmem>>, vector<8x24xbf16>
    %c0_15 = arith.constant 0 : index
    %c0_16 = arith.constant 0 : index
    %20 = vector.load %arg7[%c0_15, %c0_16] : memref<24x32xbf16, #tpu.memory_space<vmem>>, vector<24x32xbf16>
    %cst_17 = arith.constant dense<0.000000e+00> : vector<8x32xf32>
    %21 = tpu.matmul %19, %20, %cst_17 {dimension_numbers = #tpu.dot_dimension_numbers<[1], [0], [0], [1], [0, 0, 1, 1], [], []>} : vector<8x24xbf16>, vector<24x32xbf16>, vector<8x32xf32> -> vector<8x32xf32>
    %c0_18 = arith.constant 0 : index
    %c0_19 = arith.constant 0 : index
    %22 = vector.load %arg8[%c0_18, %c0_19] : memref<1x32xf32, #tpu.memory_space<vmem>>, vector<1x32xf32>
    %23 = vector.broadcast %22 : vector<1x32xf32> to vector<8x32xf32>
    %24 = arith.addf %21, %23 : vector<8x32xf32>
    %25 = arith.negf %24 : vector<8x32xf32>
    %26 = math.exp %25 : vector<8x32xf32>
    %cst_20 = arith.constant 1.000000e+00 : f32
    %27 = vector.broadcast %cst_20 : f32 to vector<8x32xf32>
    %28 = arith.addf %27, %26 : vector<8x32xf32>
    %29 = arith.divf %27, %28 : vector<8x32xf32>
    %30 = arith.truncf %29 : vector<8x32xf32> to vector<8x32xbf16>
    %c0_21 = arith.constant 0 : index
    %c0_22 = arith.constant 0 : index
    %31 = vector.load %arg9[%c0_21, %c0_22] : memref<32x128xbf16, #tpu.memory_space<vmem>>, vector<32x128xbf16>
    %cst_23 = arith.constant dense<0.000000e+00> : vector<8x128xf32>
    %32 = tpu.matmul %30, %31, %cst_23 {dimension_numbers = #tpu.dot_dimension_numbers<[1], [0], [0], [1], [0, 0, 1, 1], [], []>} : vector<8x32xbf16>, vector<32x128xbf16>, vector<8x128xf32> -> vector<8x128xf32>
    %c0_24 = arith.constant 0 : index
    %c0_25 = arith.constant 0 : index
    %33 = vector.load %arg10[%c0_24, %c0_25] : memref<1x128xf32, #tpu.memory_space<vmem>>, vector<1x128xf32>
    %34 = vector.broadcast %33 : vector<1x128xf32> to vector<8x128xf32>
    %35 = arith.addf %32, %34 : vector<8x128xf32>
    %36 = arith.truncf %35 : vector<8x128xf32> to vector<8x128xbf16>
    %c0_26 = arith.constant 0 : index
    %c0_27 = arith.constant 0 : index
    %37 = vector.load %arg12[%c0_26, %c0_27] : memref<8x128xbf16, #tpu.memory_space<vmem>>, vector<8x128xbf16>
    tpu.vector_store %arg12[%c0_26, %c0_27], %36 {strides = array<i32>} : memref<8x128xbf16, #tpu.memory_space<vmem>>, vector<8x128xbf16>,
    return
  }
  func.func @transform_0(%arg0: i32) -> (i32, i32) {
    %c0_i32 = arith.constant 0 : i32
    %c0_i32_0 = arith.constant 0 : i32
    return %arg0, %c0_i32 : i32, i32
  }
  func.func @transform_1(%arg0: i32) -> (i32, i32) {
    %c0_i32 = arith.constant 0 : i32
    %c0_i32_0 = arith.constant 0 : i32
    %c0_i32_1 = arith.constant 0 : i32
    return %c0_i32, %c0_i32_0 : i32, i32
  }
  func.func @transform_2(%arg0: i32) -> (i32, i32) {
    %c0_i32 = arith.constant 0 : i32
    %c0_i32_0 = arith.constant 0 : i32
    %c0_i32_1 = arith.constant 0 : i32
    return %c0_i32, %c0_i32_0 : i32, i32
  }
  func.func @transform_3(%arg0: i32) -> (i32, i32) {
    %c0_i32 = arith.constant 0 : i32
    %c0_i32_0 = arith.constant 0 : i32
    %c0_i32_1 = arith.constant 0 : i32
    return %c0_i32, %c0_i32_0 : i32, i32
  }
  func.func @transform_4(%arg0: i32) -> (i32, i32) {
    %c0_i32 = arith.constant 0 : i32
    %c0_i32_0 = arith.constant 0 : i32
    %c0_i32_1 = arith.constant 0 : i32
    return %c0_i32, %c0_i32_0 : i32, i32
  }
  func.func @transform_5(%arg0: i32) -> (i32, i32) {
    %c0_i32 = arith.constant 0 : i32
    %c0_i32_0 = arith.constant 0 : i32
    return %arg0, %c0_i32 : i32, i32
  }
  func.func @transform_6(%arg0: i32) -> (i32, i32) {
    %c0_i32 = arith.constant 0 : i32
    %c0_i32_0 = arith.constant 0 : i32
    %c0_i32_1 = arith.constant 0 : i32
    return %c0_i32, %c0_i32_0 : i32, i32
  }
  func.func @transform_7(%arg0: i32) -> (i32, i32) {
    %c0_i32 = arith.constant 0 : i32
    %c0_i32_0 = arith.constant 0 : i32
    %c0_i32_1 = arith.constant 0 : i32
    return %c0_i32, %c0_i32_0 : i32, i32
  }
  func.func @transform_8(%arg0: i32) -> (i32, i32) {
    %c0_i32 = arith.constant 0 : i32
    %c0_i32_0 = arith.constant 0 : i32
    %c0_i32_1 = arith.constant 0 : i32
    return %c0_i32, %c0_i32_0 : i32, i32
  }
  func.func @transform_9(%arg0: i32) -> (i32, i32) {
    %c0_i32 = arith.constant 0 : i32
    %c0_i32_0 = arith.constant 0 : i32
    %c0_i32_1 = arith.constant 0 : i32
    return %c0_i32, %c0_i32_0 : i32, i32
  }
  func.func @transform_10(%arg0: i32) -> (i32, i32) {
    %c0_i32 = arith.constant 0 : i32
    %c0_i32_0 = arith.constant 0 : i32
    return %arg0, %c0_i32 : i32, i32
  }
  func.func @transform_11(%arg0: i32) -> (i32, i32) {
    %c0_i32 = arith.constant 0 : i32
    %c0_i32_0 = arith.constant 0 : i32
    return %arg0, %c0_i32 : i32, i32
  }
}

</mosaic_0001>

<llo_original>
// kernel: dcca_forward.1
$region0: #{dcca_forward.1}
  #allocation0 [shape = 'u32[]', space=smem, size = 0x4, offset = 0x4, fixed_abs, tag = 'smem constant byte address 0x4 - core index']
  #allocation1 [shape = 'u32[144,128]{1,0:T(1,128)}', space=vmem, size = 0x12000, scoped, tag = 'internal scratch']
  %s0 = inlined_call_operand.vmem [shape: bf16[16,32], index: 0, kind: input, shape index: {}]
  %s1 = inlined_call_operand.vmem [shape: bf16[32,32], index: 1, kind: input, shape index: {}]
  %s2 = inlined_call_operand.vmem [shape: f32[1,32], index: 2, kind: input, shape index: {}]
  %s3 = inlined_call_operand.vmem [shape: bf16[32,128], index: 3, kind: input, shape index: {}]
  %s4 = inlined_call_operand.vmem [shape: f32[1,128], index: 4, kind: input, shape index: {}]
  %s5 = inlined_call_operand.vmem [shape: bf16[16,24], index: 5, kind: input, shape index: {}]
  %s6 = inlined_call_operand.vmem [shape: bf16[24,32], index: 6, kind: input, shape index: {}]
  %s7 = inlined_call_operand.vmem [shape: f32[1,32], index: 7, kind: input, shape index: {}]
  %s8 = inlined_call_operand.vmem [shape: bf16[32,128], index: 8, kind: input, shape index: {}]
  %s9 = inlined_call_operand.vmem [shape: f32[1,128], index: 9, kind: input, shape index: {}]
  %s10 = inlined_call_operand.vmem [shape: bf16[16,128], index: 10, kind: output, shape index: {0}]
  %s11 = inlined_call_operand.vmem [shape: bf16[16,128], index: 11, kind: output, shape index: {1}]
  %12 = xla_tuple %s10, %s11
  %s13 = sld [smem:[#allocation0]]
  $region81: #{dcca_forward.1} parent=0
    _
  %s15 = ssub.s32 1, %s13
  %s16 = scalar_select 0, %s15, %s13
  loop: start=0, step=1, limit=4
  $region2: #{dcca_forward.1} parent=0 // loop_pre_header
    _
  $region3: #{dcca_forward.1} parent=0 // loop_header
    %s18 = sphi 0, %s22
    %p19 = scmp.ge.s32.totalorder %s18, 4
    %s28 = sphi 0, %s30
    %s31 = sphi 0, %s28
    %s32 = sphi 0, %s31
    %s48 = sphi 0, %s32
    %s52 = sphi 0, %s52
    %s54 = sphi 0, %s52
    %s55 = sphi 0, %s54
    %s69 = sphi 0, %s55
    %s73 = sphi 0, %s73
    %s75 = sphi 0, %s73
    %s76 = sphi 0, %s75
    %s90 = sphi 0, %s76
    %s94 = sphi 0, %s94
    %s96 = sphi 0, %s94
    %s97 = sphi 0, %s96
    %s111 = sphi 0, %s97
    %s115 = sphi 0, %s115
    %s117 = sphi 0, %s115
    %s118 = sphi 0, %s117
    %s132 = sphi 0, %s118
    %s138 = sphi 0, %s140
    %s141 = sphi 0, %s138
    %s142 = sphi 0, %s141
    %s158 = sphi 0, %s142
    %s162 = sphi 0, %s162
    %s164 = sphi 0, %s162
    %s165 = sphi 0, %s164
    %s179 = sphi 0, %s165
    %s183 = sphi 0, %s183
    %s185 = sphi 0, %s183
    %s186 = sphi 0, %s185
    %s200 = sphi 0, %s186
    %s204 = sphi 0, %s204
    %s206 = sphi 0, %s204
    %s207 = sphi 0, %s206
    %s221 = sphi 0, %s207
    %s225 = sphi 0, %s225
    %s227 = sphi 0, %s225
    %s228 = sphi 0, %s227
    %s242 = sphi 0, %s228
    %s248 = sphi 0, %s250
    %s251 = sphi 0, %s248
    %s252 = sphi 0, %s251
    %s268 = sphi 0, %s252
    %s274 = sphi 0, %s276
    %s277 = sphi 0, %s274
    %s278 = sphi 0, %s277
    %s294 = sphi 0, %s278
  $region4: #{dcca_forward.1} parent=0 // loop_header_branch
    %21 = sbr.rel (%p19) target = $region8
  $region5: #{dcca_forward.1} parent=0 // loop_body
    %s23 = ssub.s32 %s18, 1
    %s24 = ssub.s32 %s18, 2
    %s25 = sadd.s32 %s18, 1
    %s26 = ssub.s32 %s18, %s25
    %p27 = scmp.eq.s32.totalorder %s26, 0
    %s29 = sadd.s32 %s28, 1
    %s30 = scalar_select %p27, %s28, %s29
    %p33 = pneg %p27
    %p34 = scmp.eq.s32.totalorder %s18, 1
    %p35 = por %p33, %p34
    %p36 = scmp.ne.s32.totalorder %s28, %s31
    %p37 = scmp.eq.s32.totalorder %s18, 0
    %p38 = por %p36, %p37
    %p39 = scmp.ne.s32.totalorder %s28, %s31
    %p40 = scmp.eq.s32.totalorder %s23, 1
    %p41 = por %p39, %p40
    %p42 = scmp.ne.s32.totalorder %s31, %s32
    %p43 = scmp.eq.s32.totalorder %s23, 0
    %p44 = por %p42, %p43
    %p45 = scmp.ne.s32.totalorder %s31, %s32
    %p46 = scmp.eq.s32.totalorder %s24, 1
    %p47 = por %p45, %p46
    %p49 = scmp.ne.s32.totalorder %s32, %s48
    %p50 = scmp.eq.s32.totalorder %s24, 0
    %p51 = por %p49, %p50
    %s53 = sadd.s32 %s52, 1
    %p56 = scmp.eq.s32.totalorder %s18, 1
    %p57 = scmp.ne.s32.totalorder %s52, %s54
    %p58 = scmp.eq.s32.totalorder %s18, 0
    %p59 = por %p57, %p58
    %p60 = scmp.ne.s32.totalorder %s52, %s54
    %p61 = scmp.eq.s32.totalorder %s23, 1
    %p62 = por %p60, %p61
    %p63 = scmp.ne.s32.totalorder %s54, %s55
    %p64 = scmp.eq.s32.totalorder %s23, 0
    %p65 = por %p63, %p64
    %p66 = scmp.ne.s32.totalorder %s54, %s55
    %p67 = scmp.eq.s32.totalorder %s24, 1
    %p68 = por %p66, %p67
    %p70 = scmp.ne.s32.totalorder %s55, %s69
    %p71 = scmp.eq.s32.totalorder %s24, 0
    %p72 = por %p70, %p71
    %s74 = sadd.s32 %s73, 1
    %p77 = scmp.eq.s32.totalorder %s18, 1
    %p78 = scmp.ne.s32.totalorder %s73, %s75
    %p79 = scmp.eq.s32.totalorder %s18, 0
    %p80 = por %p78, %p79
    %p81 = scmp.ne.s32.totalorder %s73, %s75
    %p82 = scmp.eq.s32.totalorder %s23, 1
    %p83 = por %p81, %p82
    %p84 = scmp.ne.s32.totalorder %s75, %s76
    %p85 = scmp.eq.s32.totalorder %s23, 0
    %p86 = por %p84, %p85
    %p87 = scmp.ne.s32.totalorder %s75, %s76
    %p88 = scmp.eq.s32.totalorder %s24, 1
    %p89 = por %p87, %p88
    %p91 = scmp.ne.s32.totalorder %s76, %s90
    %p92 = scmp.eq.s32.totalorder %s24, 0
    %p93 = por %p91, %p92
    %s95 = sadd.s32 %s94, 1
    %p98 = scmp.eq.s32.totalorder %s18, 1
    %p99 = scmp.ne.s32.totalorder %s94, %s96
    %p100 = scmp.eq.s32.totalorder %s18, 0
    %p101 = por %p99, %p100
    %p102 = scmp.ne.s32.totalorder %s94, %s96
    %p103 = scmp.eq.s32.totalorder %s23, 1
    %p104 = por %p102, %p103
    %p105 = scmp.ne.s32.totalorder %s96, %s97
    %p106 = scmp.eq.s32.totalorder %s23, 0
    %p107 = por %p105, %p106
    %p108 = scmp.ne.s32.totalorder %s96, %s97
    %p109 = scmp.eq.s32.totalorder %s24, 1
    %p110 = por %p108, %p109
    %p112 = scmp.ne.s32.totalorder %s97, %s111
    %p113 = scmp.eq.s32.totalorder %s24, 0
    %p114 = por %p112, %p113
    %s116 = sadd.s32 %s115, 1
    %p119 = scmp.eq.s32.totalorder %s18, 1
    %p120 = scmp.ne.s32.totalorder %s115, %s117
    %p121 = scmp.eq.s32.totalorder %s18, 0
    %p122 = por %p120, %p121
    %p123 = scmp.ne.s32.totalorder %s115, %s117
    %p124 = scmp.eq.s32.totalorder %s23, 1
    %p125 = por %p123, %p124
    %p126 = scmp.ne.s32.totalorder %s117, %s118
    %p127 = scmp.eq.s32.totalorder %s23, 0
    %p128 = por %p126, %p127
    %p129 = scmp.ne.s32.totalorder %s117, %s118
    %p130 = scmp.eq.s32.totalorder %s24, 1
    %p131 = por %p129, %p130
    %p133 = scmp.ne.s32.totalorder %s118, %s132
    %p134 = scmp.eq.s32.totalorder %s24, 0
    %p135 = por %p133, %p134
    %s136 = ssub.s32 %s18, %s25
    %p137 = scmp.eq.s32.totalorder %s136, 0
    %s139 = sadd.s32 %s138, 1
    %s140 = scalar_select %p137, %s138, %s139
    %p143 = pneg %p137
    %p144 = scmp.eq.s32.totalorder %s18, 1
    %p145 = por %p143, %p144
    %p146 = scmp.ne.s32.totalorder %s138, %s141
    %p147 = scmp.eq.s32.totalorder %s18, 0
    %p148 = por %p146, %p147
    %p149 = scmp.ne.s32.totalorder %s138, %s141
    %p150 = scmp.eq.s32.totalorder %s23, 1
    %p151 = por %p149, %p150
    %p152 = scmp.ne.s32.totalorder %s141, %s142
    %p153 = scmp.eq.s32.totalorder %s23, 0
    %p154 = por %p152, %p153
    %p155 = scmp.ne.s32.totalorder %s141, %s142
    %p156 = scmp.eq.s32.totalorder %s24, 1
    %p157 = por %p155, %p156
    %p159 = scmp.ne.s32.totalorder %s142, %s158
    %p160 = scmp.eq.s32.totalorder %s24, 0
    %p161 = por %p159, %p160
    %s163 = sadd.s32 %s162, 1
    %p166 = scmp.eq.s32.totalorder %s18, 1
    %p167 = scmp.ne.s32.totalorder %s162, %s164
    %p168 = scmp.eq.s32.totalorder %s18, 0
    %p169 = por %p167, %p168
    %p170 = scmp.ne.s32.totalorder %s162, %s164
    %p171 = scmp.eq.s32.totalorder %s23, 1
    %p172 = por %p170, %p171
    %p173 = scmp.ne.s32.totalorder %s164, %s165
    %p174 = scmp.eq.s32.totalorder %s23, 0
    %p175 = por %p173, %p174
    %p176 = scmp.ne.s32.totalorder %s164, %s165
    %p177 = scmp.eq.s32.totalorder %s24, 1
    %p178 = por %p176, %p177
    %p180 = scmp.ne.s32.totalorder %s165, %s179
    %p181 = scmp.eq.s32.totalorder %s24, 0
    %p182 = por %p180, %p181
    %s184 = sadd.s32 %s183, 1
    %p187 = scmp.eq.s32.totalorder %s18, 1
    %p188 = scmp.ne.s32.totalorder %s183, %s185
    %p189 = scmp.eq.s32.totalorder %s18, 0
    %p190 = por %p188, %p189
    %p191 = scmp.ne.s32.totalorder %s183, %s185
    %p192 = scmp.eq.s32.totalorder %s23, 1
    %p193 = por %p191, %p192
    %p194 = scmp.ne.s32.totalorder %s185, %s186
    %p195 = scmp.eq.s32.totalorder %s23, 0
    %p196 = por %p194, %p195
    %p197 = scmp.ne.s32.totalorder %s185, %s186
    %p198 = scmp.eq.s32.totalorder %s24, 1
    %p199 = por %p197, %p198
    %p201 = scmp.ne.s32.totalorder %s186, %s200
    %p202 = scmp.eq.s32.totalorder %s24, 0
    %p203 = por %p201, %p202
    %s205 = sadd.s32 %s204, 1
    %p208 = scmp.eq.s32.totalorder %s18, 1
    %p209 = scmp.ne.s32.totalorder %s204, %s206
    %p210 = scmp.eq.s32.totalorder %s18, 0
    %p211 = por %p209, %p210
    %p212 = scmp.ne.s32.totalorder %s204, %s206
    %p213 = scmp.eq.s32.totalorder %s23, 1
    %p214 = por %p212, %p213
    %p215 = scmp.ne.s32.totalorder %s206, %s207
    %p216 = scmp.eq.s32.totalorder %s23, 0
    %p217 = por %p215, %p216
    %p218 = scmp.ne.s32.totalorder %s206, %s207
    %p219 = scmp.eq.s32.totalorder %s24, 1
    %p220 = por %p218, %p219
    %p222 = scmp.ne.s32.totalorder %s207, %s221
    %p223 = scmp.eq.s32.totalorder %s24, 0
    %p224 = por %p222, %p223
    %s226 = sadd.s32 %s225, 1
    %p229 = scmp.eq.s32.totalorder %s18, 1
    %p230 = scmp.ne.s32.totalorder %s225, %s227
    %p231 = scmp.eq.s32.totalorder %s18, 0
    %p232 = por %p230, %p231
    %p233 = scmp.ne.s32.totalorder %s225, %s227
    %p234 = scmp.eq.s32.totalorder %s23, 1
    %p235 = por %p233, %p234
    %p236 = scmp.ne.s32.totalorder %s227, %s228
    %p237 = scmp.eq.s32.totalorder %s23, 0
    %p238 = por %p236, %p237
    %p239 = scmp.ne.s32.totalorder %s227, %s228
    %p240 = scmp.eq.s32.totalorder %s24, 1
    %p241 = por %p239, %p240
    %p243 = scmp.ne.s32.totalorder %s228, %s242
    %p244 = scmp.eq.s32.totalorder %s24, 0
    %p245 = por %p243, %p244
    %s246 = ssub.s32 %s18, %s25
    %p247 = scmp.eq.s32.totalorder %s246, 0
    %s249 = sadd.s32 %s248, 1
    %s250 = scalar_select %p247, %s248, %s249
    %p253 = pneg %p247
    %p254 = scmp.eq.s32.totalorder %s18, 1
    %p255 = por %p253, %p254
    %p256 = scmp.ne.s32.totalorder %s248, %s251
    %p257 = scmp.eq.s32.totalorder %s18, 0
    %p258 = por %p256, %p257
    %p259 = scmp.ne.s32.totalorder %s248, %s251
    %p260 = scmp.eq.s32.totalorder %s23, 1
    %p261 = por %p259, %p260
    %p262 = scmp.ne.s32.totalorder %s251, %s252
    %p263 = scmp.eq.s32.totalorder %s23, 0
    %p264 = por %p262, %p263
    %p265 = scmp.ne.s32.totalorder %s251, %s252
    %p266 = scmp.eq.s32.totalorder %s24, 1
    %p267 = por %p265, %p266
    %p269 = scmp.ne.s32.totalorder %s252, %s268
    %p270 = scmp.eq.s32.totalorder %s24, 0
    %p271 = por %p269, %p270
    %s272 = ssub.s32 %s18, %s25
    %p273 = scmp.eq.s32.totalorder %s272, 0
    %s275 = sadd.s32 %s274, 1
    %s276 = scalar_select %p273, %s274, %s275
    %p279 = pneg %p273
    %p280 = scmp.eq.s32.totalorder %s18, 1
    %p281 = por %p279, %p280
    %p282 = scmp.ne.s32.totalorder %s274, %s277
    %p283 = scmp.eq.s32.totalorder %s18, 0
    %p284 = por %p282, %p283
    %p285 = scmp.ne.s32.totalorder %s274, %s277
    %p286 = scmp.eq.s32.totalorder %s23, 1
    %p287 = por %p285, %p286
    %p288 = scmp.ne.s32.totalorder %s277, %s278
    %p289 = scmp.eq.s32.totalorder %s23, 0
    %p290 = por %p288, %p289
    %p291 = scmp.ne.s32.totalorder %s277, %s278
    %p292 = scmp.eq.s32.totalorder %s24, 1
    %p293 = por %p291, %p292
    %p295 = scmp.ne.s32.totalorder %s278, %s294
    %p296 = scmp.eq.s32.totalorder %s24, 0
    %p297 = por %p295, %p296
    %p298 = scmp.le.s32.totalorder 1, %s18
    %p299 = scmp.lt.s32.totalorder %s18, 3
    %p300 = pnand %p298, %p299
    %p301 = pneg %p300
    // Predicated region
    $region9: #{dcca_forward.1} parent=5 // pred_check
      _
    $region10: #{dcca_forward.1} parent=5 // pred_check_branch
      %303 = sbr.rel (%p300) target = $region12
    $region11: #{dcca_forward.1} parent=5 // pred_region
      %s304 = ssub.s32 %s18, 1
      // Predicated region
      $region13: #{dcca_forward.1} parent=11 // pred_check
        %p305 = pneg %p65
      $region14: #{dcca_forward.1} parent=11 // pred_check_branch
        %307 = sbr.rel (%p305) target = $region16
      $region15: #{dcca_forward.1} parent=11 // pred_region
        _
      $region16: #{dcca_forward.1} parent=11 // pred_fallthru
        _
      // Predicated region
      $region17: #{dcca_forward.1} parent=11 // pred_check
        %p308 = pneg %p86
      $region18: #{dcca_forward.1} parent=11 // pred_check_branch
        %310 = sbr.rel (%p308) target = $region20
      $region19: #{dcca_forward.1} parent=11 // pred_region
        _
      $region20: #{dcca_forward.1} parent=11 // pred_fallthru
        _
      // Predicated region
      $region21: #{dcca_forward.1} parent=11 // pred_check
        %p311 = pneg %p107
      $region22: #{dcca_forward.1} parent=11 // pred_check_branch
        %313 = sbr.rel (%p311) target = $region24
      $region23: #{dcca_forward.1} parent=11 // pred_region
        _
      $region24: #{dcca_forward.1} parent=11 // pred_fallthru
        _
      // Predicated region
      $region25: #{dcca_forward.1} parent=11 // pred_check
        %p314 = pneg %p128
      $region26: #{dcca_forward.1} parent=11 // pred_check_branch
        %316 = sbr.rel (%p314) target = $region28
      $region27: #{dcca_forward.1} parent=11 // pred_region
        _
      $region28: #{dcca_forward.1} parent=11 // pred_fallthru
        _
      // Predicated region
      $region29: #{dcca_forward.1} parent=11 // pred_check
        %p317 = pneg %p175
      $region30: #{dcca_forward.1} parent=11 // pred_check_branch
        %319 = sbr.rel (%p317) target = $region32
      $region31: #{dcca_forward.1} parent=11 // pred_region
        _
      $region32: #{dcca_forward.1} parent=11 // pred_fallthru
        _
      // Predicated region
      $region33: #{dcca_forward.1} parent=11 // pred_check
        %p320 = pneg %p196
      $region34: #{dcca_forward.1} parent=11 // pred_check_branch
        %322 = sbr.rel (%p320) target = $region36
      $region35: #{dcca_forward.1} parent=11 // pred_region
        _
      $region36: #{dcca_forward.1} parent=11 // pred_fallthru
        _
      // Predicated region
      $region37: #{dcca_forward.1} parent=11 // pred_check
        %p323 = pneg %p217
      $region38: #{dcca_forward.1} parent=11 // pred_check_branch
        %325 = sbr.rel (%p323) target = $region40
      $region39: #{dcca_forward.1} parent=11 // pred_region
        _
      $region40: #{dcca_forward.1} parent=11 // pred_fallthru
        _
      // Predicated region
      $region41: #{dcca_forward.1} parent=11 // pred_check
        %p326 = pneg %p238
      $region42: #{dcca_forward.1} parent=11 // pred_check_branch
        %328 = sbr.rel (%p326) target = $region44
      $region43: #{dcca_forward.1} parent=11 // pred_region
        _
      $region44: #{dcca_forward.1} parent=11 // pred_fallthru
        _
    $region12: #{dcca_forward.1} parent=5 // pred_fallthru
      _
    %p329 = scmp.lt.s32.totalorder %s18, 2
    // Predicated region
    $region45: #{dcca_forward.1} parent=5 // pred_check
      %p330 = pneg %p329
    $region46: #{dcca_forward.1} parent=5 // pred_check_branch
      %332 = sbr.rel (%p330) target = $region48
    $region47: #{dcca_forward.1} parent=5 // pred_region
      // Predicated region
      $region49: #{dcca_forward.1} parent=47 // pred_check
        %p333 = pneg %p38
      $region50: #{dcca_forward.1} parent=47 // pred_check_branch
        %335 = sbr.rel (%p333) target = $region52
      $region51: #{dcca_forward.1} parent=47 // pred_region
        %p336 = scmp.lt.s32.totalorder %s18, 1
        %s337 = scalar_select %p336, %s18, 1
        %s338 = smul.addr %s337, 4
        %s339 = scalar_lea.vmem %s0, %s338
      $region52: #{dcca_forward.1} parent=47 // pred_fallthru
        _
      // Predicated region
      $region53: #{dcca_forward.1} parent=47 // pred_check
        %p340 = pneg %p148
      $region54: #{dcca_forward.1} parent=47 // pred_check_branch
        %342 = sbr.rel (%p340) target = $region56
      $region55: #{dcca_forward.1} parent=47 // pred_region
        %p343 = scmp.lt.s32.totalorder %s18, 1
        %s344 = scalar_select %p343, %s18, 1
        %s345 = smul.addr %s344, 4
        %s346 = scalar_lea.vmem %s5, %s345
      $region56: #{dcca_forward.1} parent=47 // pred_fallthru
        _
    $region48: #{dcca_forward.1} parent=5 // pred_fallthru
      _
    %p347 = scmp.le.s32.totalorder 1, %s18
    %p348 = scmp.lt.s32.totalorder %s18, 3
    %p349 = pnand %p347, %p348
    %p350 = pneg %p349
    // Predicated region
    $region57: #{dcca_forward.1} parent=5 // pred_check
      _
    $region58: #{dcca_forward.1} parent=5 // pred_check_branch
      %352 = sbr.rel (%p349) target = $region60
    $region59: #{dcca_forward.1} parent=5 // pred_region
      %s353 = ssub.s32 %s18, 1
      %p354 = scmp.lt.s32.totalorder %s23, 1
      %s355 = scalar_select %p354, %s23, 1
      %s356 = smul.addr %s355, 4
      %s357 = scalar_lea.vmem %s0, %s356
      %p358 = pneg %p44
      %p359 = pneg %p41
      %p360 = pneg %p65
      %p361 = pneg %p62
      %p362 = pneg %p86
      %p363 = pneg %p83
      %p364 = pneg %p107
      %p365 = pneg %p104
      %p366 = pneg %p128
      %p367 = pneg %p125
      %p368 = scmp.lt.s32.totalorder %s23, 1
      %s369 = scalar_select %p368, %s23, 1
      %s370 = smul.addr %s369, 4
      %s371 = scalar_lea.vmem %s5, %s370
      %p372 = pneg %p154
      %p373 = pneg %p151
      %p374 = pneg %p175
      %p375 = pneg %p172
      %p376 = pneg %p196
      %p377 = pneg %p193
      %p378 = pneg %p217
      %p379 = pneg %p214
      %p380 = pneg %p238
      %p381 = pneg %p235
      %p382 = pneg %p264
      %p383 = pneg %p261
      %p384 = scmp.lt.s32.totalorder %s23, 1
      %s385 = scalar_select %p384, %s23, 1
      %s386 = smul.addr %s385, 4
      %s387 = scalar_lea.vmem %s10, %s386
      %p388 = pneg %p290
      %p389 = pneg %p287
      %p390 = scmp.lt.s32.totalorder %s23, 1
      %s391 = scalar_select %p390, %s23, 1
      %s392 = smul.addr %s391, 4
      %s393 = scalar_lea.vmem %s11, %s392
      %p394 = scmp.lt.s32.totalorder %s23, 1
      %s395 = scalar_select %p394, %s23, 1
      %s396 = smul.addr %s395, 4
      %s397 = scalar_lea.vmem %s0, %s396
      %p398 = scmp.lt.s32.totalorder %s23, 1
      %s399 = scalar_select %p398, %s23, 1
      %s400 = smul.addr %s399, 4
      %s401 = scalar_lea.vmem %s5, %s400
      %p402 = scmp.lt.s32.totalorder %s23, 1
      %s403 = scalar_select %p402, %s23, 1
      %s404 = smul.addr %s403, 4
      %s405 = scalar_lea.vmem %s10, %s404
      %p406 = scmp.lt.s32.totalorder %s23, 1
      %s407 = scalar_select %p406, %s23, 1
      %s408 = smul.addr %s407, 4
      %s409 = scalar_lea.vmem %s11, %s408
      %v411 = vld [vmem:[%s397] sm:$0xf]
      %v412 = vld [vmem:[%s1] sm:$0xf]
      %v413 = vld [vmem:[%s1 + $0x4] sm:$0xf]
      %v414 = vld [vmem:[%s1 + $0x8] sm:$0xf]
      %v415 = vld [vmem:[%s1 + $0xc] sm:$0xf]
      %v416 = vld [vmem:[%s2] sm:$0x1]
      %v418 = vlaneseq
      %v419 = vshrl.u32 %v418, 7
      %v420 = vsub.s32 0, %v419
      %v421 = vrot.slane %v416, %v420
      %v427 = vunpack.c.l.b16 %v412
      %v428 = vunpack.c.l.b16 %v413
      %v429 = vunpack.c.l.b16 %v414
      %v430 = vunpack.c.l.b16 %v415
      %v431 = vpack.c.b16 %v428, %v427
      %v432 = vpack.c.b16 %v430, %v429
      %vm435 = vcmask 261120
      %v437 = vsel %vm435, %v411, 0
      %439 = vmatprep.subr.bf16.mxu0 0
      %440 = vmatpush1.bf16.msra.mxu0 %v431
      %441 = vmatprep.subr.bf16.mxu0 0
      %442 = vmatpush1.bf16.msra.mxu0 %v432
      %443 = vmatprep.subr.bf16.mxu0 0
      %444 = vmatpush1.bf16.msra.mxu0 0
      %445 = vmatprep.subr.bf16.mxu0 0
      %446 = vmatpush1.bf16.msra.mxu0 0
      %447 = vmatprep.subr.bf16.mxu0 0
      %448 = vmatpush1.bf16.msra.mxu0 0
      %449 = vmatprep.subr.bf16.mxu0 0
      %450 = vmatpush1.bf16.msra.mxu0 0
      %451 = vmatprep.subr.bf16.mxu0 0
      %452 = vmatpush1.bf16.msra.mxu0 0
      %453 = vmatprep.subr.bf16.mxu0 0
      %454 = vmatpush1.bf16.msra.mxu0 0
      %455 = vmatprep.subr.bf16.mxu0 0
      %456 = vmatpush1.bf16.msra.mxu0 0
      %457 = vmatprep.subr.bf16.mxu0 0
      %458 = vmatpush1.bf16.msra.mxu0 0
      %459 = vmatprep.subr.bf16.mxu0 0
      %460 = vmatpush1.bf16.msra.mxu0 0
      %461 = vmatprep.subr.bf16.mxu0 0
      %462 = vmatpush1.bf16.msra.mxu0 0
      %463 = vmatprep.subr.bf16.mxu0 0
      %464 = vmatpush1.bf16.msra.mxu0 0
      %465 = vmatprep.subr.bf16.mxu0 0
      %466 = vmatpush1.bf16.msra.mxu0 0
      %467 = vmatprep.subr.bf16.mxu0 0
      %468 = vmatpush1.bf16.msra.mxu0 0
      %469 = vmatprep.subr.bf16.mxu0 0
      %470 = vmatpush1.bf16.msra.mxu0 0
      %471 = vmatprep.mubr.bf16.mxu0 0
      %472 = vmatmul.mubr.bf16.gmra.mrb[0].mxu0 %v437
      %v473 = vpop.f32.mrb[0].mxu0
      %v474 = vadd.f32 %v421, %v473
      %v475 = vpop.f32.mrb[0].mxu0
      %v476 = vpop.f32.mrb[0].mxu0
      %v477 = vpop.f32.mrb[0].mxu0
      %478 = vdwg.mxu0
      %v479 = vxor.u32 %v474, 2147483648
      %v480 = vmul.f32 %v479, 1.442695
      %v481 = vpow.pop %v480
      %v482 = vadd.f32 %v481, 1.0
      %v483 = vrcp.pop %v482
      %v484 = vmul.f32 1.0, %v483
      %v485 = vpack.c.bf16 %v484, %v484
      %v486 = vld [vmem:[%s3] sm:$0xf]
      %v487 = vld [vmem:[%s3 + $0x4] sm:$0xf]
      %v488 = vld [vmem:[%s3 + $0x8] sm:$0xf]
      %v489 = vld [vmem:[%s3 + $0xc] sm:$0xf]
      %v490 = vld [vmem:[%s4] sm:$0x1]
      %v492 = vlaneseq
      %v493 = vshrl.u32 %v492, 7
      %v494 = vsub.s32 0, %v493
      %v495 = vrot.slane %v490, %v494
      %v501 = vunpack.c.l.b16 %v486
      %v502 = vunpack.c.l.b16 %v487
      %v503 = vunpack.c.l.b16 %v488
      %v504 = vunpack.c.l.b16 %v489
      %v505 = vpack.c.b16 %v502, %v501
      %v506 = vpack.c.b16 %v504, %v503
      %v510 = vsel %vm435, %v485, 0
      %512 = vmatprep.subr.bf16.mxu0 0
      %513 = vmatpush1.bf16.msra.mxu0 %v505
      %514 = vmatprep.subr.bf16.mxu0 0
      %515 = vmatpush1.bf16.msra.mxu0 %v506
      %516 = vmatprep.subr.bf16.mxu0 0
      %517 = vmatpush1.bf16.msra.mxu0 0
      %518 = vmatprep.subr.bf16.mxu0 0
      %519 = vmatpush1.bf16.msra.mxu0 0
      %520 = vmatprep.subr.bf16.mxu0 0
      %521 = vmatpush1.bf16.msra.mxu0 0
      %522 = vmatprep.subr.bf16.mxu0 0
      %523 = vmatpush1.bf16.msra.mxu0 0
      %524 = vmatprep.subr.bf16.mxu0 0
      %525 = vmatpush1.bf16.msra.mxu0 0
      %526 = vmatprep.subr.bf16.mxu0 0
      %527 = vmatpush1.bf16.msra.mxu0 0
      %528 = vmatprep.subr.bf16.mxu0 0
      %529 = vmatpush1.bf16.msra.mxu0 0
      %530 = vmatprep.subr.bf16.mxu0 0
      %531 = vmatpush1.bf16.msra.mxu0 0
      %532 = vmatprep.subr.bf16.mxu0 0
      %533 = vmatpush1.bf16.msra.mxu0 0
      %534 = vmatprep.subr.bf16.mxu0 0
      %535 = vmatpush1.bf16.msra.mxu0 0
      %536 = vmatprep.subr.bf16.mxu0 0
      %537 = vmatpush1.bf16.msra.mxu0 0
      %538 = vmatprep.subr.bf16.mxu0 0
      %539 = vmatpush1.bf16.msra.mxu0 0
      %540 = vmatprep.subr.bf16.mxu0 0
      %541 = vmatpush1.bf16.msra.mxu0 0
      %542 = vmatprep.subr.bf16.mxu0 0
      %543 = vmatpush1.bf16.msra.mxu0 0
      %544 = vmatprep.mubr.bf16.mxu0 0
      %545 = vmatmul.mubr.bf16.gmra.mrb[0].mxu0 %v510
      %v546 = vpop.f32.mrb[0].mxu0
      %v547 = vadd.f32 %v495, %v546
      %v548 = vpop.f32.mrb[0].mxu0
      %v549 = vpop.f32.mrb[0].mxu0
      %v550 = vpop.f32.mrb[0].mxu0
      %551 = vdwg.mxu0
      %v552 = vpack.c.bf16 %v547, %v547
      %553 = vst [vmem:[%s405] sm:$0xf] %v552
      %v554 = vld [vmem:[%s401] sm:$0xf]
      %v555 = vld [vmem:[%s6] sm:$0xf]
      %v556 = vld [vmem:[%s6 + $0x4] sm:$0xf]
      %v557 = vld [vmem:[%s6 + $0x8] sm:$0xf]
      %v558 = vld [vmem:[%s7] sm:$0x1]
      %v560 = vlaneseq
      %v561 = vshrl.u32 %v560, 7
      %v562 = vsub.s32 0, %v561
      %v563 = vrot.slane %v558, %v562
      %v568 = vunpack.c.l.b16 %v555
      %v569 = vunpack.c.l.b16 %v556
      %v570 = vunpack.c.l.b16 %v557
      %v571 = vpack.c.b16 %v569, %v568
      %v572 = vpack.c.b16 %v570, %v570
      %vm574 = vcmask 195584
      %v576 = vsel %vm574, %v554, 0
      %vm578 = vcmask 1043456
      %v580 = vsel %vm578, %v572, 0
      %582 = vmatprep.subr.bf16.mxu0 0
      %583 = vmatpush1.bf16.msra.mxu0 %v571
      %584 = vmatprep.subr.bf16.mxu0 0
      %585 = vmatpush1.bf16.msra.mxu0 %v580
      %586 = vmatprep.subr.bf16.mxu0 0
      %587 = vmatpush1.bf16.msra.mxu0 0
      %588 = vmatprep.subr.bf16.mxu0 0
      %589 = vmatpush1.bf16.msra.mxu0 0
      %590 = vmatprep.subr.bf16.mxu0 0
      %591 = vmatpush1.bf16.msra.mxu0 0
      %592 = vmatprep.subr.bf16.mxu0 0
      %593 = vmatpush1.bf16.msra.mxu0 0
      %594 = vmatprep.subr.bf16.mxu0 0
      %595 = vmatpush1.bf16.msra.mxu0 0
      %596 = vmatprep.subr.bf16.mxu0 0
      %597 = vmatpush1.bf16.msra.mxu0 0
      %598 = vmatprep.subr.bf16.mxu0 0
      %599 = vmatpush1.bf16.msra.mxu0 0
      %600 = vmatprep.subr.bf16.mxu0 0
      %601 = vmatpush1.bf16.msra.mxu0 0
      %602 = vmatprep.subr.bf16.mxu0 0
      %603 = vmatpush1.bf16.msra.mxu0 0
      %604 = vmatprep.subr.bf16.mxu0 0
      %605 = vmatpush1.bf16.msra.mxu0 0
      %606 = vmatprep.subr.bf16.mxu0 0
      %607 = vmatpush1.bf16.msra.mxu0 0
      %608 = vmatprep.subr.bf16.mxu0 0
      %609 = vmatpush1.bf16.msra.mxu0 0
      %610 = vmatprep.subr.bf16.mxu0 0
      %611 = vmatpush1.bf16.msra.mxu0 0
      %612 = vmatprep.subr.bf16.mxu0 0
      %613 = vmatpush1.bf16.msra.mxu0 0
      %614 = vmatprep.mubr.bf16.mxu0 0
      %615 = vmatmul.mubr.bf16.gmra.mrb[0].mxu0 %v576
      %v616 = vpop.f32.mrb[0].mxu0
      %v617 = vadd.f32 %v563, %v616
      %v618 = vpop.f32.mrb[0].mxu0
      %v619 = vpop.f32.mrb[0].mxu0
      %v620 = vpop.f32.mrb[0].mxu0
      %621 = vdwg.mxu0
      %v622 = vxor.u32 %v617, 2147483648
      %v623 = vmul.f32 %v622, 1.442695
      %v624 = vpow.pop %v623
      %v625 = vadd.f32 %v624, 1.0
      %v626 = vrcp.pop %v625
      %v627 = vmul.f32 1.0, %v626
      %v628 = vpack.c.bf16 %v627, %v627
      %v629 = vld [vmem:[%s8] sm:$0xf]
      %v630 = vld [vmem:[%s8 + $0x4] sm:$0xf]
      %v631 = vld [vmem:[%s8 + $0x8] sm:$0xf]
      %v632 = vld [vmem:[%s8 + $0xc] sm:$0xf]
      %v633 = vld [vmem:[%s9] sm:$0x1]
      %v635 = vlaneseq
      %v636 = vshrl.u32 %v635, 7
      %v637 = vsub.s32 0, %v636
      %v638 = vrot.slane %v633, %v637
      %v644 = vunpack.c.l.b16 %v629
      %v645 = vunpack.c.l.b16 %v630
      %v646 = vunpack.c.l.b16 %v631
      %v647 = vunpack.c.l.b16 %v632
      %v648 = vpack.c.b16 %v645, %v644
      %v649 = vpack.c.b16 %v647, %v646
      %v653 = vsel %vm435, %v628, 0
      %655 = vmatprep.subr.bf16.mxu0 0
      %656 = vmatpush1.bf16.msra.mxu0 %v648
      %657 = vmatprep.subr.bf16.mxu0 0
      %658 = vmatpush1.bf16.msra.mxu0 %v649
      %659 = vmatprep.subr.bf16.mxu0 0
      %660 = vmatpush1.bf16.msra.mxu0 0
      %661 = vmatprep.subr.bf16.mxu0 0
      %662 = vmatpush1.bf16.msra.mxu0 0
      %663 = vmatprep.subr.bf16.mxu0 0
      %664 = vmatpush1.bf16.msra.mxu0 0
      %665 = vmatprep.subr.bf16.mxu0 0
      %666 = vmatpush1.bf16.msra.mxu0 0
      %667 = vmatprep.subr.bf16.mxu0 0
      %668 = vmatpush1.bf16.msra.mxu0 0
      %669 = vmatprep.subr.bf16.mxu0 0
      %670 = vmatpush1.bf16.msra.mxu0 0
      %671 = vmatprep.subr.bf16.mxu0 0
      %672 = vmatpush1.bf16.msra.mxu0 0
      %673 = vmatprep.subr.bf16.mxu0 0
      %674 = vmatpush1.bf16.msra.mxu0 0
      %675 = vmatprep.subr.bf16.mxu0 0
      %676 = vmatpush1.bf16.msra.mxu0 0
      %677 = vmatprep.subr.bf16.mxu0 0
      %678 = vmatpush1.bf16.msra.mxu0 0
      %679 = vmatprep.subr.bf16.mxu0 0
      %680 = vmatpush1.bf16.msra.mxu0 0
      %681 = vmatprep.subr.bf16.mxu0 0
      %682 = vmatpush1.bf16.msra.mxu0 0
      %683 = vmatprep.subr.bf16.mxu0 0
      %684 = vmatpush1.bf16.msra.mxu0 0
      %685 = vmatprep.subr.bf16.mxu0 0
      %686 = vmatpush1.bf16.msra.mxu0 0
      %687 = vmatprep.mubr.bf16.mxu0 0
      %688 = vmatmul.mubr.bf16.gmra.mrb[0].mxu0 %v653
      %v689 = vpop.f32.mrb[0].mxu0
      %v690 = vadd.f32 %v638, %v689
      %v691 = vpop.f32.mrb[0].mxu0
      %v692 = vpop.f32.mrb[0].mxu0
      %v693 = vpop.f32.mrb[0].mxu0
      %694 = vdwg.mxu0
      %v695 = vpack.c.bf16 %v690, %v690
      %696 = vst [vmem:[%s409] sm:$0xf] %v695
      %p697 = scmp.lt.s32.totalorder %s23, 1
      %s698 = scalar_select %p697, %s23, 1
      %s699 = smul.addr %s698, 4
      %s700 = scalar_lea.vmem %s10, %s699
      %p701 = scmp.lt.s32.totalorder %s23, 1
      %s702 = scalar_select %p701, %s23, 1
      %s703 = smul.addr %s702, 4
      %s704 = scalar_lea.vmem %s11, %s703
      // Predicated region
      $region61: #{dcca_forward.1} parent=59 // pred_check
        %p705 = pneg %p261
      $region62: #{dcca_forward.1} parent=59 // pred_check_branch
        %707 = sbr.rel (%p705) target = $region64
      $region63: #{dcca_forward.1} parent=59 // pred_region
        _
      $region64: #{dcca_forward.1} parent=59 // pred_fallthru
        _
      // Predicated region
      $region65: #{dcca_forward.1} parent=59 // pred_check
        %p708 = pneg %p287
      $region66: #{dcca_forward.1} parent=59 // pred_check_branch
        %710 = sbr.rel (%p708) target = $region68
      $region67: #{dcca_forward.1} parent=59 // pred_region
        _
      $region68: #{dcca_forward.1} parent=59 // pred_fallthru
        _
    $region60: #{dcca_forward.1} parent=5 // pred_fallthru
      _
    %p711 = scmp.le.s32.totalorder 2, %s18
    // Predicated region
    $region69: #{dcca_forward.1} parent=5 // pred_check
      %p712 = pneg %p711
    $region70: #{dcca_forward.1} parent=5 // pred_check_branch
      %714 = sbr.rel (%p712) target = $region72
    $region71: #{dcca_forward.1} parent=5 // pred_region
      %s715 = ssub.s32 %s18, 2
      // Predicated region
      $region73: #{dcca_forward.1} parent=71 // pred_check
        %p716 = pneg %p267
      $region74: #{dcca_forward.1} parent=71 // pred_check_branch
        %718 = sbr.rel (%p716) target = $region76
      $region75: #{dcca_forward.1} parent=71 // pred_region
        %p719 = scmp.lt.s32.totalorder %s24, 1
        %s720 = scalar_select %p719, %s24, 1
        %s721 = smul.addr %s720, 4
        %s722 = scalar_lea.vmem %s10, %s721
      $region76: #{dcca_forward.1} parent=71 // pred_fallthru
        _
      // Predicated region
      $region77: #{dcca_forward.1} parent=71 // pred_check
        %p723 = pneg %p293
      $region78: #{dcca_forward.1} parent=71 // pred_check_branch
        %725 = sbr.rel (%p723) target = $region80
      $region79: #{dcca_forward.1} parent=71 // pred_region
        %p726 = scmp.lt.s32.totalorder %s24, 1
        %s727 = scalar_select %p726, %s24, 1
        %s728 = smul.addr %s727, 4
        %s729 = scalar_lea.vmem %s11, %s728
      $region80: #{dcca_forward.1} parent=71 // pred_fallthru
        _
    $region72: #{dcca_forward.1} parent=5 // pred_fallthru
      _
  $region6: #{dcca_forward.1} parent=0 // loop_footer
    %s22 = sadd.s32 1, %s18
  $region7: #{dcca_forward.1} parent=0 // loop_footer_branch
    %17 = sbr.rel target = $region3
  $region8: #{dcca_forward.1} parent=0 // loop_exit
    _

</llo_original>
